<compile_context>
chip_gen: v6e
topology: v6e:2x2x1
jax: 0.10.0
libtpu: 0.0.40
codegen_flags: <defaults>
</compile_context>

<pallas_src>
import functools
import math

import jax
import jax.numpy as jnp
from jax.experimental import pallas as pl
from jax.experimental.pallas import tpu as pltpu


def _cdiv(a, b):
    return -(-a // b)


def _round_up(x, m):
    return ((x + m - 1) // m) * m


# ----------------------------- Pallas kernel --------------------------------

def mlp_kernel(xt_ref, w1_ref, b1_ref, w2_ref, b2_ref, o_ref, *, hc, slope):
    # xt_ref: (tb, K) f32      w1_ref: (K, H)  bf16   b1_ref: (1, H)  f32
    # w2_ref: (H, Dp) bf16     b2_ref: (1, Dp) f32    o_ref:  (tb, Dp) f32
    xt = xt_ref[...].astype(jnp.bfloat16)
    tb = xt_ref.shape[0]
    H = w1_ref.shape[1]
    Dp = w2_ref.shape[1]

    acc = jnp.zeros((tb, Dp), jnp.float32)
    # Static Python loop over hidden chunks: each (tb, hc) slice of the hidden
    # activation stays near-vreg-resident instead of round-tripping via VMEM.
    for s in range(0, H, hc):
        e = min(s + hc, H)
        h = jnp.dot(xt, w1_ref[:, s:e], preferred_element_type=jnp.float32)
        h = h + b1_ref[:, s:e]
        h = jnp.maximum(h, slope * h)                    # LeakyReLU (0.01)
        acc = acc + jnp.dot(h.astype(jnp.bfloat16), w2_ref[s:e, :],
                            preferred_element_type=jnp.float32)
    o_ref[...] = (acc + b2_ref[...]).astype(o_ref.dtype)


def denoiser_mlp(xt, w1, b1, w2, b2, *, d_out, tb=512, hc=256, slope=0.01):
    """xt: (B, K) f32 = concat([x, t_emb], -1).  w1 (K,H) / w2 (H,Dp) bf16,
    b1 (1,H) / b2 (1,Dp) f32; w2/b2 already zero-padded to a lane-dense Dp
    (multiple of 128).  Returns (B, d_out) in xt.dtype."""
    B, K = xt.shape
    H = w1.shape[1]
    Dp = w2.shape[1]

    # Balanced batch tiles (multiple of 8); force >= 2 grid steps when B allows
    # so the parallel axis shards across v7x's two TensorCores; bounded padding.
    n_tiles = max(2, _cdiv(B, tb))
    tb_eff = min(_round_up(_cdiv(B, n_tiles), 8), _round_up(B, 8))
    Bp = _round_up(B, tb_eff)
    if Bp != B:
        xt = jnp.pad(xt, ((0, Bp - B), (0, 0)))
    grid = (Bp // tb_eff,)

    flops = 2 * Bp * (K * H + H * Dp)
    bytes_accessed = (Bp * K * 4 + Bp * Dp * 4
                      + w1.size * 2 + w2.size * 2 + b1.size * 4 + b2.size * 4)

    kernel = functools.partial(mlp_kernel, hc=hc, slope=slope)

    out = pl.pallas_call(
        kernel,
        out_shape=jax.ShapeDtypeStruct((Bp, Dp), xt.dtype),
        grid_spec=pltpu.PrefetchScalarGridSpec(
            num_scalar_prefetch=0,
            grid=grid,
            in_specs=[
                pl.BlockSpec((tb_eff, K), lambda i: (i, 0)),   # [x | t_emb] tile
                pl.BlockSpec((K, H), lambda i: (0, 0)),        # W1 (resident)
                pl.BlockSpec((1, H), lambda i: (0, 0)),        # b1
                pl.BlockSpec((H, Dp), lambda i: (0, 0)),       # W2 (padded, resident)
                pl.BlockSpec((1, Dp), lambda i: (0, 0)),       # b2 (padded)
            ],
            out_specs=pl.BlockSpec((tb_eff, Dp), lambda i: (i, 0)),
        ),
        compiler_params=pltpu.CompilerParams(
            dimension_semantics=("parallel",)),
        cost_estimate=pl.CostEstimate(
            flops=flops, transcendentals=0, bytes_accessed=bytes_accessed),
    )(xt, w1, b1, w2, b2)

    # TODO(synk): downstream consumers could read the padded (Bp, Dp) buffer
    # directly to avoid this extra slice copy when wired into a larger model.
    return out[:B, :d_out]


# ------------------------------ Glue / model --------------------------------

def sine_cosine_timestep_embedding(t, time_emb_dim, max_period=10000.0):
    """Matches DiffusionDenoiser.sine_cosine_transform_timesteps:
    freqs = exp(-log(max_period) * arange(half) / half); [cos | sin] order."""
    half = time_emb_dim // 2
    freqs = jnp.exp(
        -math.log(max_period) * jnp.arange(half, dtype=jnp.float32) / half)
    args = t[:, None].astype(jnp.float32) * freqs[None, :]
    emb = jnp.concatenate([jnp.cos(args), jnp.sin(args)], axis=-1)
    if time_emb_dim % 2:
        emb = jnp.concatenate([emb, jnp.zeros_like(emb[:, :1])], axis=-1)
    return emb


class DiffusionDenoiserPallas:
    """Sinusoidal-time-emb MLP denoiser: Linear -> LeakyReLU -> Linear."""

    def __init__(self, input_dim, hidden_dims=(1024,), time_emb_dim=16,
                 activation='lrelu', time_emb_type='sinusoidal', key=None,
                 tb=512, hc=256):
        # TODO(synk): 'learnable' time embedding, relu/sigmoid/tanh activations
        # and multi-hidden-layer stacks are not wired up (module defaults only).
        assert time_emb_type == 'sinusoidal'
        assert activation == 'lrelu'
        hidden_dims = list(hidden_dims)
        assert len(hidden_dims) == 1
        hidden_dim = hidden_dims[0]

        self.input_dim = input_dim
        self.hidden_dim = hidden_dim
        self.time_emb_dim = time_emb_dim
        self.tb = tb
        self.hc = hc
        prev_dim = input_dim + time_emb_dim if time_emb_dim > 0 else input_dim

        key = jax.random.PRNGKey(42) if key is None else key
        k1, k2, k3, k4 = jax.random.split(key, 4)
        # Deterministic init (uniform, Kaiming-style bound like nn.Linear).
        bnd1 = 1.0 / math.sqrt(prev_dim)
        bnd2 = 1.0 / math.sqrt(hidden_dim)
        w1 = jax.random.uniform(k1, (prev_dim, hidden_dim), jnp.float32,
                                -bnd1, bnd1)
        b1 = jax.random.uniform(k2, (1, hidden_dim), jnp.float32, -bnd1, bnd1)
        w2 = jax.random.uniform(k3, (hidden_dim, input_dim), jnp.float32,
                                -bnd2, bnd2)
        b2 = jax.random.uniform(k4, (1, input_dim), jnp.float32, -bnd2, bnd2)

        # bf16 resident weights (f32 accumulation happens on the MXU).
        self.w1 = w1.astype(jnp.bfloat16)       # (D_in + T, H) — cat([x, t]) order
        self.b1 = b1                             # f32 bias

        # Lane-dense output: zero-pad the output feature dim to a 128 multiple.
        self.d_pad = _round_up(max(input_dim, 128), 128)
        self.w2 = jnp.pad(w2, ((0, 0), (0, self.d_pad - input_dim))
                          ).astype(jnp.bfloat16)
        self.b2 = jnp.pad(b2, ((0, 0), (0, self.d_pad - input_dim)))  # f32

    def __call__(self, x, t):
        # x: (B, input_dim) f32, t: (B,)
        t_emb = sine_cosine_timestep_embedding(t, self.time_emb_dim)
        xt = jnp.concatenate([x, t_emb.astype(x.dtype)], axis=-1)
        return denoiser_mlp(xt, self.w1, self.b1, self.w2, self.b2,
                            d_out=self.input_dim, tb=self.tb, hc=self.hc)

    # Pure-JAX reference (same bf16-operand / f32-accumulation recipe).
    def reference(self, x, t):
        t_emb = sine_cosine_timestep_embedding(t, self.time_emb_dim)
        xt = jnp.concatenate([x, t_emb.astype(x.dtype)], axis=-1)
        h = jnp.dot(xt.astype(jnp.bfloat16), self.w1,
                    preferred_element_type=jnp.float32)
        h = h + self.b1
        h = jnp.maximum(h, 0.01 * h)
        out = jnp.dot(h.astype(jnp.bfloat16), self.w2,
                      preferred_element_type=jnp.float32)
        out = out + self.b2
        return out[:, :self.input_dim].astype(x.dtype)


# --------------------------------- main --------------------------------------

if __name__ == "__main__":
    B, INPUT_DIM, HIDDEN, TIME_EMB = 8, 32, 1024, 16

    key = jax.random.PRNGKey(0)
    kx, kt, kp = jax.random.split(key, 3)
    x = jax.random.normal(kx, (B, INPUT_DIM), dtype=jnp.float32)
    t = jax.random.randint(kt, (B,), 0, 1000).astype(jnp.float32)

    model = DiffusionDenoiserPallas(INPUT_DIM, [HIDDEN], TIME_EMB, key=kp)

    out = model(x, t)
    out = jax.block_until_ready(out)

    ref = model.reference(x, t)
    assert out.shape == (B, INPUT_DIM)
    assert jnp.allclose(out, ref, atol=1e-2, rtol=1e-2), "mismatch vs reference"

    print("KERNEL_OK")
</pallas_src>

<mosaic_0001>
module attributes {stable_mosaic.version = 11 : i64} {
  func.func @mlp_kernel(%arg0: i32, %arg1: memref<8x48xf32, #tpu.memory_space<vmem>>, %arg2: memref<48x1024xbf16, #tpu.memory_space<vmem>>, %arg3: memref<1x1024xf32, #tpu.memory_space<vmem>>, %arg4: memref<1024x128xbf16, #tpu.memory_space<vmem>>, %arg5: memref<1x128xf32, #tpu.memory_space<vmem>>, %arg6: memref<8x128xf32, #tpu.memory_space<vmem>>) attributes {dimension_semantics = [#tpu.dimension_semantics<parallel>], iteration_bounds = array<i64: 1>, scalar_prefetch = 0 : i64, scratch_operands = 0 : i64, tpu.core_type = #tpu.core_type<tc>, window_params = [{transform_indices = @transform_0, window_bounds = array<i64: 8, 48>}, {pipeline_mode = #tpu.pipeline_mode<synchronous>, transform_indices = @transform_1, window_bounds = array<i64: 48, 1024>}, {pipeline_mode = #tpu.pipeline_mode<synchronous>, transform_indices = @transform_2, window_bounds = array<i64: 1, 1024>}, {pipeline_mode = #tpu.pipeline_mode<synchronous>, transform_indices = @transform_3, window_bounds = array<i64: 1024, 128>}, {pipeline_mode = #tpu.pipeline_mode<synchronous>, transform_indices = @transform_4, window_bounds = array<i64: 1, 128>}, {transform_indices = @transform_5, window_bounds = array<i64: 8, 128>}]} {
    %c0 = arith.constant 0 : index
    %c0_0 = arith.constant 0 : index
    %0 = vector.load %arg1[%c0, %c0_0] : memref<8x48xf32, #tpu.memory_space<vmem>>, vector<8x48xf32>
    %1 = arith.truncf %0 : vector<8x48xf32> to vector<8x48xbf16>
    %cst = arith.constant 0.000000e+00 : f32
    %2 = vector.broadcast %cst : f32 to vector<8x128xf32>
    %c0_1 = arith.constant 0 : index
    %c0_2 = arith.constant 0 : index
    %3 = vector.load %arg2[%c0_1, %c0_2] : memref<48x1024xbf16, #tpu.memory_space<vmem>>, vector<48x256xbf16>
    %cst_3 = arith.constant dense<0.000000e+00> : vector<8x256xf32>
    %4 = tpu.matmul %1, %3, %cst_3 {dimension_numbers = #tpu.dot_dimension_numbers<[1], [0], [0], [1], [0, 0, 1, 1], [], []>} : vector<8x48xbf16>, vector<48x256xbf16>, vector<8x256xf32> -> vector<8x256xf32>
    %c0_4 = arith.constant 0 : index
    %c0_5 = arith.constant 0 : index
    %5 = vector.load %arg3[%c0_4, %c0_5] : memref<1x1024xf32, #tpu.memory_space<vmem>>, vector<1x256xf32>
    %6 = vector.broadcast %5 : vector<1x256xf32> to vector<8x256xf32>
    %7 = arith.addf %4, %6 : vector<8x256xf32>
    %cst_6 = arith.constant 0.00999999977 : f32
    %8 = vector.broadcast %cst_6 : f32 to vector<8x256xf32>
    %9 = arith.mulf %8, %7 : vector<8x256xf32>
    %10 = arith.maximumf %7, %9 : vector<8x256xf32>
    %11 = arith.truncf %10 : vector<8x256xf32> to vector<8x256xbf16>
    %c0_7 = arith.constant 0 : index
    %c0_8 = arith.constant 0 : index
    %12 = vector.load %arg4[%c0_7, %c0_8] : memref<1024x128xbf16, #tpu.memory_space<vmem>>, vector<256x128xbf16>
    %cst_9 = arith.constant dense<0.000000e+00> : vector<8x128xf32>
    %13 = tpu.matmul %11, %12, %cst_9 {dimension_numbers = #tpu.dot_dimension_numbers<[1], [0], [0], [1], [0, 0, 1, 1], [], []>} : vector<8x256xbf16>, vector<256x128xbf16>, vector<8x128xf32> -> vector<8x128xf32>
    %14 = arith.addf %2, %13 : vector<8x128xf32>
    %c0_10 = arith.constant 0 : index
    %c256 = arith.constant 256 : index
    %15 = vector.load %arg2[%c0_10, %c256] : memref<48x1024xbf16, #tpu.memory_space<vmem>>, vector<48x256xbf16>
    %cst_11 = arith.constant dense<0.000000e+00> : vector<8x256xf32>
    %16 = tpu.matmul %1, %15, %cst_11 {dimension_numbers = #tpu.dot_dimension_numbers<[1], [0], [0], [1], [0, 0, 1, 1], [], []>} : vector<8x48xbf16>, vector<48x256xbf16>, vector<8x256xf32> -> vector<8x256xf32>
    %c0_12 = arith.constant 0 : index
    %c256_13 = arith.constant 256 : index
    %17 = vector.load %arg3[%c0_12, %c256_13] : memref<1x1024xf32, #tpu.memory_space<vmem>>, vector<1x256xf32>
    %18 = vector.broadcast %17 : vector<1x256xf32> to vector<8x256xf32>
    %19 = arith.addf %16, %18 : vector<8x256xf32>
    %cst_14 = arith.constant 0.00999999977 : f32
    %20 = vector.broadcast %cst_14 : f32 to vector<8x256xf32>
    %21 = arith.mulf %20, %19 : vector<8x256xf32>
    %22 = arith.maximumf %19, %21 : vector<8x256xf32>
    %23 = arith.truncf %22 : vector<8x256xf32> to vector<8x256xbf16>
    %c256_15 = arith.constant 256 : index
    %c0_16 = arith.constant 0 : index
    %24 = vector.load %arg4[%c256_15, %c0_16] : memref<1024x128xbf16, #tpu.memory_space<vmem>>, vector<256x128xbf16>
    %cst_17 = arith.constant dense<0.000000e+00> : vector<8x128xf32>
    %25 = tpu.matmul %23, %24, %cst_17 {dimension_numbers = #tpu.dot_dimension_numbers<[1], [0], [0], [1], [0, 0, 1, 1], [], []>} : vector<8x256xbf16>, vector<256x128xbf16>, vector<8x128xf32> -> vector<8x128xf32>
    %26 = arith.addf %14, %25 : vector<8x128xf32>
    %c0_18 = arith.constant 0 : index
    %c512 = arith.constant 512 : index
    %27 = vector.load %arg2[%c0_18, %c512] : memref<48x1024xbf16, #tpu.memory_space<vmem>>, vector<48x256xbf16>
    %cst_19 = arith.constant dense<0.000000e+00> : vector<8x256xf32>
    %28 = tpu.matmul %1, %27, %cst_19 {dimension_numbers = #tpu.dot_dimension_numbers<[1], [0], [0], [1], [0, 0, 1, 1], [], []>} : vector<8x48xbf16>, vector<48x256xbf16>, vector<8x256xf32> -> vector<8x256xf32>
    %c0_20 = arith.constant 0 : index
    %c512_21 = arith.constant 512 : index
    %29 = vector.load %arg3[%c0_20, %c512_21] : memref<1x1024xf32, #tpu.memory_space<vmem>>, vector<1x256xf32>
    %30 = vector.broadcast %29 : vector<1x256xf32> to vector<8x256xf32>
    %31 = arith.addf %28, %30 : vector<8x256xf32>
    %cst_22 = arith.constant 0.00999999977 : f32
    %32 = vector.broadcast %cst_22 : f32 to vector<8x256xf32>
    %33 = arith.mulf %32, %31 : vector<8x256xf32>
    %34 = arith.maximumf %31, %33 : vector<8x256xf32>
    %35 = arith.truncf %34 : vector<8x256xf32> to vector<8x256xbf16>
    %c512_23 = arith.constant 512 : index
    %c0_24 = arith.constant 0 : index
    %36 = vector.load %arg4[%c512_23, %c0_24] : memref<1024x128xbf16, #tpu.memory_space<vmem>>, vector<256x128xbf16>
    %cst_25 = arith.constant dense<0.000000e+00> : vector<8x128xf32>
    %37 = tpu.matmul %35, %36, %cst_25 {dimension_numbers = #tpu.dot_dimension_numbers<[1], [0], [0], [1], [0, 0, 1, 1], [], []>} : vector<8x256xbf16>, vector<256x128xbf16>, vector<8x128xf32> -> vector<8x128xf32>
    %38 = arith.addf %26, %37 : vector<8x128xf32>
    %c0_26 = arith.constant 0 : index
    %c768 = arith.constant 768 : index
    %39 = vector.load %arg2[%c0_26, %c768] : memref<48x1024xbf16, #tpu.memory_space<vmem>>, vector<48x256xbf16>
    %cst_27 = arith.constant dense<0.000000e+00> : vector<8x256xf32>
    %40 = tpu.matmul %1, %39, %cst_27 {dimension_numbers = #tpu.dot_dimension_numbers<[1], [0], [0], [1], [0, 0, 1, 1], [], []>} : vector<8x48xbf16>, vector<48x256xbf16>, vector<8x256xf32> -> vector<8x256xf32>
    %c0_28 = arith.constant 0 : index
    %c768_29 = arith.constant 768 : index
    %41 = vector.load %arg3[%c0_28, %c768_29] : memref<1x1024xf32, #tpu.memory_space<vmem>>, vector<1x256xf32>
    %42 = vector.broadcast %41 : vector<1x256xf32> to vector<8x256xf32>
    %43 = arith.addf %40, %42 : vector<8x256xf32>
    %cst_30 = arith.constant 0.00999999977 : f32
    %44 = vector.broadcast %cst_30 : f32 to vector<8x256xf32>
    %45 = arith.mulf %44, %43 : vector<8x256xf32>
    %46 = arith.maximumf %43, %45 : vector<8x256xf32>
    %47 = arith.truncf %46 : vector<8x256xf32> to vector<8x256xbf16>
    %c768_31 = arith.constant 768 : index
    %c0_32 = arith.constant 0 : index
    %48 = vector.load %arg4[%c768_31, %c0_32] : memref<1024x128xbf16, #tpu.memory_space<vmem>>, vector<256x128xbf16>
    %cst_33 = arith.constant dense<0.000000e+00> : vector<8x128xf32>
    %49 = tpu.matmul %47, %48, %cst_33 {dimension_numbers = #tpu.dot_dimension_numbers<[1], [0], [0], [1], [0, 0, 1, 1], [], []>} : vector<8x256xbf16>, vector<256x128xbf16>, vector<8x128xf32> -> vector<8x128xf32>
    %50 = arith.addf %38, %49 : vector<8x128xf32>
    %c0_34 = arith.constant 0 : index
    %c0_35 = arith.constant 0 : index
    %51 = vector.load %arg5[%c0_34, %c0_35] : memref<1x128xf32, #tpu.memory_space<vmem>>, vector<1x128xf32>
    %52 = vector.broadcast %51 : vector<1x128xf32> to vector<8x128xf32>
    %53 = arith.addf %50, %52 : vector<8x128xf32>
    %c0_36 = arith.constant 0 : index
    %c0_37 = arith.constant 0 : index
    %54 = vector.load %arg6[%c0_36, %c0_37] : memref<8x128xf32, #tpu.memory_space<vmem>>, vector<8x128xf32>
    tpu.vector_store %arg6[%c0_36, %c0_37], %53 {strides = array<i32>} : memref<8x128xf32, #tpu.memory_space<vmem>>, vector<8x128xf32>,
    return
  }
  func.func @transform_0(%arg0: i32) -> (i32, i32) {
    %c0_i32 = arith.constant 0 : i32
    %c0_i32_0 = arith.constant 0 : i32
    return %arg0, %c0_i32 : i32, i32
  }
  func.func @transform_1(%arg0: i32) -> (i32, i32) {
    %c0_i32 = arith.constant 0 : i32
    %c0_i32_0 = arith.constant 0 : i32
    %c0_i32_1 = arith.constant 0 : i32
    return %c0_i32, %c0_i32_0 : i32, i32
  }
  func.func @transform_2(%arg0: i32) -> (i32, i32) {
    %c0_i32 = arith.constant 0 : i32
    %c0_i32_0 = arith.constant 0 : i32
    %c0_i32_1 = arith.constant 0 : i32
    return %c0_i32, %c0_i32_0 : i32, i32
  }
  func.func @transform_3(%arg0: i32) -> (i32, i32) {
    %c0_i32 = arith.constant 0 : i32
    %c0_i32_0 = arith.constant 0 : i32
    %c0_i32_1 = arith.constant 0 : i32
    return %c0_i32, %c0_i32_0 : i32, i32
  }
  func.func @transform_4(%arg0: i32) -> (i32, i32) {
    %c0_i32 = arith.constant 0 : i32
    %c0_i32_0 = arith.constant 0 : i32
    %c0_i32_1 = arith.constant 0 : i32
    return %c0_i32, %c0_i32_0 : i32, i32
  }
  func.func @transform_5(%arg0: i32) -> (i32, i32) {
    %c0_i32 = arith.constant 0 : i32
    %c0_i32_0 = arith.constant 0 : i32
    return %arg0, %c0_i32 : i32, i32
  }
}

</mosaic_0001>

<llo_original>
// kernel: tpu_custom_call.1
$region0: #{tpu_custom_call.1}
  #allocation0 [shape = 'u32[]', space=smem, size = 0x4, offset = 0x4, fixed_abs, tag = 'smem constant byte address 0x4 - core index']
  #allocation1 [shape = 'u32[144,128]{1,0:T(1,128)}', space=vmem, size = 0x12000, scoped, tag = 'internal scratch']
  %s0 = inlined_call_operand.hbm [shape: f32[8,48], index: 0, kind: input, shape index: {}]
  %s1 = inlined_call_operand.hbm [shape: bf16[48,1024], index: 1, kind: input, shape index: {}]
  %s2 = inlined_call_operand.hbm [shape: f32[1,1024], index: 2, kind: input, shape index: {}]
  %s3 = inlined_call_operand.hbm [shape: bf16[1024,128], index: 3, kind: input, shape index: {}]
  %s4 = inlined_call_operand.vmem [shape: f32[1,128], index: 4, kind: input, shape index: {}]
  %s5 = inlined_call_operand.hbm [shape: f32[8,128], index: 5, kind: output, shape index: {}]
  %s6 = sld [smem:[#allocation0]]
  $region46: #{tpu_custom_call.1} parent=0
    _
  %s8 = ssub.s32 1, %s6
  %s9 = scalar_select 0, %s8, %s6
  $region1: #{tpu_custom_call.1} parent=0
    #allocation2 [shape = 'u8[4096]{0}', space=vmem, size = 0x1000, scoped, tag = 'input window, operand 0, single buffered']
    #allocation3 [shape = 's32[1]{0}', space=sflag, size = 0x4, scoped, tag = 'scoped memory for tpu_custom_call.1']
    #allocation4 [shape = 's32[1]{0}', space=sflag, size = 0x4, scoped, tag = 'scoped memory for tpu_custom_call.1']
    #allocation5 [shape = 'u8[98304]{0}', space=vmem, size = 0x18000, scoped, tag = 'input window, operand 1, single buffered']
    #allocation6 [shape = 's32[1]{0}', space=sflag, size = 0x4, scoped, tag = 'scoped memory for tpu_custom_call.1']
    #allocation7 [shape = 'u8[4096]{0}', space=vmem, size = 0x1000, scoped, tag = 'input window, operand 2, single buffered']
    #allocation8 [shape = 'u8[262144]{0}', space=vmem, size = 0x40000, scoped, tag = 'input window, operand 3, single buffered']
    #allocation9 [shape = 's32[1]{0}', space=sflag, size = 0x4, scoped, tag = 'scoped memory for tpu_custom_call.1']
    #allocation10 [shape = 'u8[4096]{0}', space=vmem, size = 0x1000, scoped, tag = 'output window, operand 0, single buffered']
    %10 = vsyncpa [#allocation3], 0
    %11 = vsyncpa [#allocation6], 0
    %12 = vsyncpa [#allocation9], 0
    %13 = vsyncpa [#allocation4], 0
    // Predicated region
    $region2: #{tpu_custom_call.1} parent=1 // pred_check
      _
    $region3: #{tpu_custom_call.1} parent=1 // pred_check_branch
      %15 = sbr.rel (0) target = $region5
    $region4: #{tpu_custom_call.1} parent=1 // pred_region
      %s17 = ssub.s32 128, 128
      %18 = vsyncadd [#allocation3], %s17
      %s20 = sshll.u32 [#allocation2], 4
      %s21 = int_to_ptr.vmem [resolvable:$true] %s20
      %23 = dma.hbm_to_vmem [thread:$0]  %s0, 128, %s21, [#allocation3]
    $region5: #{tpu_custom_call.1} parent=1 // pred_fallthru
      _
    // Predicated region
    $region6: #{tpu_custom_call.1} parent=1 // pred_check
      _
    $region7: #{tpu_custom_call.1} parent=1 // pred_check_branch
      %25 = sbr.rel (0) target = $region9
    $region8: #{tpu_custom_call.1} parent=1 // pred_region
      %s27 = ssub.s32 3072, 3072
      %28 = vsyncadd [#allocation6], %s27
      %s29 = sshll.u32 [#allocation5], 4
      %s30 = int_to_ptr.vmem [resolvable:$true] %s29
      %35 = dma.hbm_to_vmem [thread:$0]  %s1, 3072, %s30, [#allocation6], 512, 512, 32
    $region9: #{tpu_custom_call.1} parent=1 // pred_fallthru
      _
    // Predicated region
    $region10: #{tpu_custom_call.1} parent=1 // pred_check
      _
    $region11: #{tpu_custom_call.1} parent=1 // pred_check_branch
      %37 = sbr.rel (0) target = $region13
    $region12: #{tpu_custom_call.1} parent=1 // pred_region
      %s39 = ssub.s32 128, 128
      %40 = vsyncadd [#allocation6], %s39
      %s42 = sshll.u32 [#allocation7], 4
      %s43 = int_to_ptr.vmem [resolvable:$true] %s42
      %45 = dma.hbm_to_vmem [thread:$0]  %s2, 128, %s43, [#allocation6]
    $region13: #{tpu_custom_call.1} parent=1 // pred_fallthru
      _
    // Predicated region
    $region14: #{tpu_custom_call.1} parent=1 // pred_check
      _
    $region15: #{tpu_custom_call.1} parent=1 // pred_check_branch
      %47 = sbr.rel (0) target = $region17
    $region16: #{tpu_custom_call.1} parent=1 // pred_region
      %s49 = ssub.s32 8192, 8192
      %50 = vsyncadd [#allocation9], %s49
      %s51 = sshll.u32 [#allocation8], 4
      %s52 = int_to_ptr.vmem [resolvable:$true] %s51
      %57 = dma.hbm_to_vmem [thread:$0]  %s3, 8192, %s52, [#allocation9], 64, 64, 4
    $region17: #{tpu_custom_call.1} parent=1 // pred_fallthru
      _
    // Predicated region
    $region18: #{tpu_custom_call.1} parent=1 // pred_check
      _
    $region19: #{tpu_custom_call.1} parent=1 // pred_check_branch
      %59 = sbr.rel (0) target = $region21
    $region20: #{tpu_custom_call.1} parent=1 // pred_region
      _
    $region21: #{tpu_custom_call.1} parent=1 // pred_fallthru
      _
    // Predicated region
    $region22: #{tpu_custom_call.1} parent=1 // pred_check
      _
    $region23: #{tpu_custom_call.1} parent=1 // pred_check_branch
      %61 = sbr.rel (0) target = $region25
    $region24: #{tpu_custom_call.1} parent=1 // pred_region
      %62 = dma.done [#allocation3], 128
    $region25: #{tpu_custom_call.1} parent=1 // pred_fallthru
      _
    // Predicated region
    $region26: #{tpu_custom_call.1} parent=1 // pred_check
      _
    $region27: #{tpu_custom_call.1} parent=1 // pred_check_branch
      %64 = sbr.rel (0) target = $region29
    $region28: #{tpu_custom_call.1} parent=1 // pred_region
      %65 = dma.done [#allocation6], 3072
    $region29: #{tpu_custom_call.1} parent=1 // pred_fallthru
      _
    // Predicated region
    $region30: #{tpu_custom_call.1} parent=1 // pred_check
      _
    $region31: #{tpu_custom_call.1} parent=1 // pred_check_branch
      %67 = sbr.rel (0) target = $region33
    $region32: #{tpu_custom_call.1} parent=1 // pred_region
      %68 = dma.done [#allocation6], 128
    $region33: #{tpu_custom_call.1} parent=1 // pred_fallthru
      _
    // Predicated region
    $region34: #{tpu_custom_call.1} parent=1 // pred_check
      _
    $region35: #{tpu_custom_call.1} parent=1 // pred_check_branch
      %70 = sbr.rel (0) target = $region37
    $region36: #{tpu_custom_call.1} parent=1 // pred_region
      %71 = dma.done [#allocation9], 8192
    $region37: #{tpu_custom_call.1} parent=1 // pred_fallthru
      _
    %v73 = vld [vmem:[#allocation2] sm:$0xff]
    %v74 = vpack.c.bf16 %v73, %v73
    %v75 = vld [vmem:[#allocation5] sm:$0xff]
    %v76 = vld [vmem:[#allocation5 + $0x20] sm:$0xff]
    %v77 = vld [vmem:[#allocation5 + $0x40] sm:$0xff]
    %v78 = vld [vmem:[#allocation5 + $0x60] sm:$0xff]
    %v79 = vld [vmem:[#allocation5 + $0x80] sm:$0xff]
    %v80 = vld [vmem:[#allocation5 + $0xa0] sm:$0xff]
    %v81 = vld [vmem:[#allocation7] sm:$0x3]
    %v83 = vlaneseq
    %v84 = vshrl.u32 %v83, 7
    %v85 = vsub.s32 0, %v84
    %v86 = vrot.slane %v81, %v85
    %v87 = vlaneseq
    %v88 = vshrl.u32 %v87, 7
    %v89 = vsub.s32 1, %v88
    %v90 = vrot.slane %v81, %v89
    %v99 = vunpack.c.l.b16 %v75
    %v100 = vunpack.c.h.b16 %v75
    %v101 = vunpack.c.l.b16 %v76
    %v102 = vunpack.c.h.b16 %v76
    %v103 = vunpack.c.l.b16 %v77
    %v104 = vunpack.c.h.b16 %v77
    %v105 = vunpack.c.l.b16 %v78
    %v106 = vunpack.c.h.b16 %v78
    %v107 = vunpack.c.l.b16 %v79
    %v108 = vunpack.c.h.b16 %v79
    %v109 = vunpack.c.l.b16 %v80
    %v110 = vunpack.c.h.b16 %v80
    %v111 = vpack.c.b16 %v101, %v99
    %v112 = vpack.c.b16 %v102, %v100
    %v113 = vpack.c.b16 %v105, %v103
    %v114 = vpack.c.b16 %v106, %v104
    %v115 = vpack.c.b16 %v109, %v107
    %v116 = vpack.c.b16 %v110, %v108
    %vm123 = vcmask 392192
    %v125 = vsel %vm123, %v74, 0
    %127 = vmatprep.subr.bf16.mxu0 0
    %128 = vmatpush1.bf16.msra.mxu0 0
    %129 = vmatprep.subr.bf16.mxu0 0
    %130 = vmatpush1.bf16.msra.mxu0 0
    %131 = vmatprep.subr.bf16.mxu0 0
    %132 = vmatpush1.bf16.msra.mxu0 0
    %133 = vmatprep.subr.bf16.mxu0 0
    %134 = vmatpush1.bf16.msra.mxu0 0
    %135 = vmatprep.subr.bf16.mxu0 0
    %136 = vmatpush1.bf16.msra.mxu0 0
    %137 = vmatprep.subr.bf16.mxu0 %v116
    %138 = vmatpush1.bf16.msra.mxu0 %v115
    %139 = vmatprep.subr.bf16.mxu0 %v114
    %140 = vmatpush1.bf16.msra.mxu0 %v113
    %141 = vmatprep.subr.bf16.mxu0 %v112
    %142 = vmatpush1.bf16.msra.mxu0 %v111
    %143 = vmatprep.subr.bf16.mxu0 0
    %144 = vmatpush2.bf16.msra.mxu0 0
    %145 = vmatprep.subr.bf16.mxu0 0
    %146 = vmatpush2.bf16.msra.mxu0 0
    %147 = vmatprep.subr.bf16.mxu0 0
    %148 = vmatpush2.bf16.msra.mxu0 0
    %149 = vmatprep.subr.bf16.mxu0 0
    %150 = vmatpush2.bf16.msra.mxu0 0
    %151 = vmatprep.subr.bf16.mxu0 0
    %152 = vmatpush2.bf16.msra.mxu0 0
    %153 = vmatprep.subr.bf16.mxu0 0
    %154 = vmatpush2.bf16.msra.mxu0 0
    %155 = vmatprep.subr.bf16.mxu0 0
    %156 = vmatpush2.bf16.msra.mxu0 0
    %157 = vmatprep.subr.bf16.mxu0 0
    %158 = vmatpush2.bf16.msra.mxu0 0
    %159 = vmatprep.mubr.bf16.mxu0 0
    %160 = vmatmul.mubr.bf16.gmra.mxu0 %v125
    %v161 = vpop.f32.mrf.mxu0
    %v162 = vadd.f32 %v86, %v161
    %v163 = vpop.f32.mrf.mxu0
    %v164 = vadd.f32 %v90, %v163
    %v165 = vpop.f32.mrf.mxu0
    %v166 = vpop.f32.mrf.mxu0
    %167 = vdwg.mxu0
    %v168 = vmul.f32 %v162, 0.01
    %v169 = vmul.f32 %v164, 0.01
    %v170 = vmax.f32 %v162, %v168
    %v171 = vmax.f32 %v164, %v169
    %v172 = vpack.c.bf16 %v170, %v170
    %v173 = vpack.c.bf16 %v171, %v171
    %v174 = vld [vmem:[#allocation8] sm:$0xf]
    %v175 = vld [vmem:[#allocation8 + $0x4] sm:$0xf]
    %v176 = vld [vmem:[#allocation8 + $0x8] sm:$0xf]
    %v177 = vld [vmem:[#allocation8 + $0xc] sm:$0xf]
    %v178 = vld [vmem:[#allocation8 + $0x10] sm:$0xf]
    %v179 = vld [vmem:[#allocation8 + $0x14] sm:$0xf]
    %v180 = vld [vmem:[#allocation8 + $0x18] sm:$0xf]
    %v181 = vld [vmem:[#allocation8 + $0x1c] sm:$0xf]
    %v182 = vld [vmem:[#allocation8 + $0x20] sm:$0xf]
    %v183 = vld [vmem:[#allocation8 + $0x24] sm:$0xf]
    %v184 = vld [vmem:[#allocation8 + $0x28] sm:$0xf]
    %v185 = vld [vmem:[#allocation8 + $0x2c] sm:$0xf]
    %v186 = vld [vmem:[#allocation8 + $0x30] sm:$0xf]
    %v187 = vld [vmem:[#allocation8 + $0x34] sm:$0xf]
    %v188 = vld [vmem:[#allocation8 + $0x38] sm:$0xf]
    %v189 = vld [vmem:[#allocation8 + $0x3c] sm:$0xf]
    %v190 = vld [vmem:[#allocation8 + $0x40] sm:$0xf]
    %v191 = vld [vmem:[#allocation8 + $0x44] sm:$0xf]
    %v192 = vld [vmem:[#allocation8 + $0x48] sm:$0xf]
    %v193 = vld [vmem:[#allocation8 + $0x4c] sm:$0xf]
    %v194 = vld [vmem:[#allocation8 + $0x50] sm:$0xf]
    %v195 = vld [vmem:[#allocation8 + $0x54] sm:$0xf]
    %v196 = vld [vmem:[#allocation8 + $0x58] sm:$0xf]
    %v197 = vld [vmem:[#allocation8 + $0x5c] sm:$0xf]
    %v198 = vld [vmem:[#allocation8 + $0x60] sm:$0xf]
    %v199 = vld [vmem:[#allocation8 + $0x64] sm:$0xf]
    %v200 = vld [vmem:[#allocation8 + $0x68] sm:$0xf]
    %v201 = vld [vmem:[#allocation8 + $0x6c] sm:$0xf]
    %v202 = vld [vmem:[#allocation8 + $0x70] sm:$0xf]
    %v203 = vld [vmem:[#allocation8 + $0x74] sm:$0xf]
    %v204 = vld [vmem:[#allocation8 + $0x78] sm:$0xf]
    %v205 = vld [vmem:[#allocation8 + $0x7c] sm:$0xf]
    %v206 = vld [vmem:[#allocation5 + $0x8] sm:$0xff]
    %v207 = vld [vmem:[#allocation5 + $0x28] sm:$0xff]
    %v208 = vld [vmem:[#allocation5 + $0x48] sm:$0xff]
    %v209 = vld [vmem:[#allocation5 + $0x68] sm:$0xff]
    %v210 = vld [vmem:[#allocation5 + $0x88] sm:$0xff]
    %v211 = vld [vmem:[#allocation5 + $0xa8] sm:$0xff]
    %v212 = vld [vmem:[#allocation7 + $0x2] sm:$0x3]
    %v214 = vlaneseq
    %v215 = vshrl.u32 %v214, 7
    %v216 = vsub.s32 0, %v215
    %v217 = vrot.slane %v212, %v216
    %v218 = vlaneseq
    %v219 = vshrl.u32 %v218, 7
    %v220 = vsub.s32 1, %v219
    %v221 = vrot.slane %v212, %v220
    %v230 = vunpack.c.l.b16 %v206
    %v231 = vunpack.c.h.b16 %v206
    %v232 = vunpack.c.l.b16 %v207
    %v233 = vunpack.c.h.b16 %v207
    %v234 = vunpack.c.l.b16 %v208
    %v235 = vunpack.c.h.b16 %v208
    %v236 = vunpack.c.l.b16 %v209
    %v237 = vunpack.c.h.b16 %v209
    %v238 = vunpack.c.l.b16 %v210
    %v239 = vunpack.c.h.b16 %v210
    %v240 = vunpack.c.l.b16 %v211
    %v241 = vunpack.c.h.b16 %v211
    %v242 = vpack.c.b16 %v232, %v230
    %v243 = vpack.c.b16 %v233, %v231
    %v244 = vpack.c.b16 %v236, %v234
    %v245 = vpack.c.b16 %v237, %v235
    %v246 = vpack.c.b16 %v240, %v238
    %v247 = vpack.c.b16 %v241, %v239
    %254 = vmatprep.subr.bf16.mxu0 0
    %255 = vmatpush1.bf16.msra.mxu0 0
    %256 = vmatprep.subr.bf16.mxu0 0
    %257 = vmatpush1.bf16.msra.mxu0 0
    %258 = vmatprep.subr.bf16.mxu0 0
    %259 = vmatpush1.bf16.msra.mxu0 0
    %260 = vmatprep.subr.bf16.mxu0 0
    %261 = vmatpush1.bf16.msra.mxu0 0
    %262 = vmatprep.subr.bf16.mxu0 0
    %263 = vmatpush1.bf16.msra.mxu0 0
    %264 = vmatprep.subr.bf16.mxu0 %v247
    %265 = vmatpush1.bf16.msra.mxu0 %v246
    %266 = vmatprep.subr.bf16.mxu0 %v245
    %267 = vmatpush1.bf16.msra.mxu0 %v244
    %268 = vmatprep.subr.bf16.mxu0 %v243
    %269 = vmatpush1.bf16.msra.mxu0 %v242
    %270 = vmatprep.subr.bf16.mxu0 0
    %271 = vmatpush2.bf16.msra.mxu0 0
    %272 = vmatprep.subr.bf16.mxu0 0
    %273 = vmatpush2.bf16.msra.mxu0 0
    %274 = vmatprep.subr.bf16.mxu0 0
    %275 = vmatpush2.bf16.msra.mxu0 0
    %276 = vmatprep.subr.bf16.mxu0 0
    %277 = vmatpush2.bf16.msra.mxu0 0
    %278 = vmatprep.subr.bf16.mxu0 0
    %279 = vmatpush2.bf16.msra.mxu0 0
    %280 = vmatprep.subr.bf16.mxu0 0
    %281 = vmatpush2.bf16.msra.mxu0 0
    %282 = vmatprep.subr.bf16.mxu0 0
    %283 = vmatpush2.bf16.msra.mxu0 0
    %284 = vmatprep.subr.bf16.mxu0 0
    %285 = vmatpush2.bf16.msra.mxu0 0
    %286 = vmatprep.mubr.bf16.mxu0 0
    %287 = vmatmul.mubr.bf16.gmra.mxu0 %v125
    %v288 = vpop.f32.mrf.mxu0
    %v289 = vadd.f32 %v217, %v288
    %v290 = vpop.f32.mrf.mxu0
    %v291 = vadd.f32 %v221, %v290
    %v292 = vpop.f32.mrf.mxu0
    %v293 = vpop.f32.mrf.mxu0
    %294 = vdwg.mxu0
    %v295 = vmul.f32 %v289, 0.01
    %v296 = vmul.f32 %v291, 0.01
    %v297 = vmax.f32 %v289, %v295
    %v298 = vmax.f32 %v291, %v296
    %v299 = vpack.c.bf16 %v297, %v297
    %v300 = vpack.c.bf16 %v298, %v298
    %v301 = vld [vmem:[#allocation8 + $0x80] sm:$0xf]
    %v302 = vld [vmem:[#allocation8 + $0x84] sm:$0xf]
    %v303 = vld [vmem:[#allocation8 + $0x88] sm:$0xf]
    %v304 = vld [vmem:[#allocation8 + $0x8c] sm:$0xf]
    %v305 = vld [vmem:[#allocation8 + $0x90] sm:$0xf]
    %v306 = vld [vmem:[#allocation8 + $0x94] sm:$0xf]
    %v307 = vld [vmem:[#allocation8 + $0x98] sm:$0xf]
    %v308 = vld [vmem:[#allocation8 + $0x9c] sm:$0xf]
    %v309 = vld [vmem:[#allocation8 + $0xa0] sm:$0xf]
    %v310 = vld [vmem:[#allocation8 + $0xa4] sm:$0xf]
    %v311 = vld [vmem:[#allocation8 + $0xa8] sm:$0xf]
    %v312 = vld [vmem:[#allocation8 + $0xac] sm:$0xf]
    %v313 = vld [vmem:[#allocation8 + $0xb0] sm:$0xf]
    %v314 = vld [vmem:[#allocation8 + $0xb4] sm:$0xf]
    %v315 = vld [vmem:[#allocation8 + $0xb8] sm:$0xf]
    %v316 = vld [vmem:[#allocation8 + $0xbc] sm:$0xf]
    %v317 = vld [vmem:[#allocation8 + $0xc0] sm:$0xf]
    %v318 = vld [vmem:[#allocation8 + $0xc4] sm:$0xf]
    %v319 = vld [vmem:[#allocation8 + $0xc8] sm:$0xf]
    %v320 = vld [vmem:[#allocation8 + $0xcc] sm:$0xf]
    %v321 = vld [vmem:[#allocation8 + $0xd0] sm:$0xf]
    %v322 = vld [vmem:[#allocation8 + $0xd4] sm:$0xf]
    %v323 = vld [vmem:[#allocation8 + $0xd8] sm:$0xf]
    %v324 = vld [vmem:[#allocation8 + $0xdc] sm:$0xf]
    %v325 = vld [vmem:[#allocation8 + $0xe0] sm:$0xf]
    %v326 = vld [vmem:[#allocation8 + $0xe4] sm:$0xf]
    %v327 = vld [vmem:[#allocation8 + $0xe8] sm:$0xf]
    %v328 = vld [vmem:[#allocation8 + $0xec] sm:$0xf]
    %v329 = vld [vmem:[#allocation8 + $0xf0] sm:$0xf]
    %v330 = vld [vmem:[#allocation8 + $0xf4] sm:$0xf]
    %v331 = vld [vmem:[#allocation8 + $0xf8] sm:$0xf]
    %v332 = vld [vmem:[#allocation8 + $0xfc] sm:$0xf]
    %v365 = vunpack.c.l.b16 %v301
    %v366 = vunpack.c.l.b16 %v302
    %v367 = vunpack.c.l.b16 %v303
    %v368 = vunpack.c.l.b16 %v304
    %v369 = vunpack.c.l.b16 %v305
    %v370 = vunpack.c.l.b16 %v306
    %v371 = vunpack.c.l.b16 %v307
    %v372 = vunpack.c.l.b16 %v308
    %v373 = vunpack.c.l.b16 %v309
    %v374 = vunpack.c.l.b16 %v310
    %v375 = vunpack.c.l.b16 %v311
    %v376 = vunpack.c.l.b16 %v312
    %v377 = vunpack.c.l.b16 %v313
    %v378 = vunpack.c.l.b16 %v314
    %v379 = vunpack.c.l.b16 %v315
    %v380 = vunpack.c.l.b16 %v316
    %v381 = vunpack.c.l.b16 %v317
    %v382 = vunpack.c.l.b16 %v318
    %v383 = vunpack.c.l.b16 %v319
    %v384 = vunpack.c.l.b16 %v320
    %v385 = vunpack.c.l.b16 %v321
    %v386 = vunpack.c.l.b16 %v322
    %v387 = vunpack.c.l.b16 %v323
    %v388 = vunpack.c.l.b16 %v324
    %v389 = vunpack.c.l.b16 %v325
    %v390 = vunpack.c.l.b16 %v326
    %v391 = vunpack.c.l.b16 %v327
    %v392 = vunpack.c.l.b16 %v328
    %v393 = vunpack.c.l.b16 %v329
    %v394 = vunpack.c.l.b16 %v330
    %v395 = vunpack.c.l.b16 %v331
    %v396 = vunpack.c.l.b16 %v332
    %v397 = vpack.c.b16 %v366, %v365
    %v398 = vpack.c.b16 %v368, %v367
    %v399 = vpack.c.b16 %v370, %v369
    %v400 = vpack.c.b16 %v372, %v371
    %v401 = vpack.c.b16 %v374, %v373
    %v402 = vpack.c.b16 %v376, %v375
    %v403 = vpack.c.b16 %v378, %v377
    %v404 = vpack.c.b16 %v380, %v379
    %v405 = vpack.c.b16 %v382, %v381
    %v406 = vpack.c.b16 %v384, %v383
    %v407 = vpack.c.b16 %v386, %v385
    %v408 = vpack.c.b16 %v388, %v387
    %v409 = vpack.c.b16 %v390, %v389
    %v410 = vpack.c.b16 %v392, %v391
    %v411 = vpack.c.b16 %v394, %v393
    %v412 = vpack.c.b16 %v396, %v395
    %429 = vmatprep.subr.bf16.mxu0 0
    %430 = vmatpush1.bf16.msra.mxu0 %v404
    %431 = vmatprep.subr.bf16.mxu0 0
    %432 = vmatpush1.bf16.msra.mxu0 %v403
    %433 = vmatprep.subr.bf16.mxu0 0
    %434 = vmatpush1.bf16.msra.mxu0 %v402
    %435 = vmatprep.subr.bf16.mxu0 0
    %436 = vmatpush1.bf16.msra.mxu0 %v401
    %437 = vmatprep.subr.bf16.mxu0 0
    %438 = vmatpush1.bf16.msra.mxu0 %v400
    %439 = vmatprep.subr.bf16.mxu0 0
    %440 = vmatpush1.bf16.msra.mxu0 %v399
    %441 = vmatprep.subr.bf16.mxu0 0
    %442 = vmatpush1.bf16.msra.mxu0 %v398
    %443 = vmatprep.subr.bf16.mxu0 0
    %444 = vmatpush1.bf16.msra.mxu0 %v397
    %445 = vmatprep.subr.bf16.mxu0 0
    %446 = vmatpush2.bf16.msra.mxu0 %v412
    %447 = vmatprep.subr.bf16.mxu0 0
    %448 = vmatpush2.bf16.msra.mxu0 %v411
    %449 = vmatprep.subr.bf16.mxu0 0
    %450 = vmatpush2.bf16.msra.mxu0 %v410
    %451 = vmatprep.subr.bf16.mxu0 0
    %452 = vmatpush2.bf16.msra.mxu0 %v409
    %453 = vmatprep.subr.bf16.mxu0 0
    %454 = vmatpush2.bf16.msra.mxu0 %v408
    %455 = vmatprep.subr.bf16.mxu0 0
    %456 = vmatpush2.bf16.msra.mxu0 %v407
    %457 = vmatprep.subr.bf16.mxu0 0
    %458 = vmatpush2.bf16.msra.mxu0 %v406
    %459 = vmatprep.subr.bf16.mxu0 0
    %460 = vmatpush2.bf16.msra.mxu0 %v405
    %461 = vmatprep.mubr.bf16.mxu0 %v300
    %462 = vmatmul.mubr.bf16.gmra.mxu0 %v299
    %v463 = vpop.f32.mrf.mxu0
    %v464 = vadd.f32 0.0, %v463
    %v465 = vpop.f32.mrf.mxu0
    %v466 = vpop.f32.mrf.mxu0
    %v467 = vpop.f32.mrf.mxu0
    %468 = vdwg.mxu0
    %v501 = vunpack.c.l.b16 %v174
    %v502 = vunpack.c.l.b16 %v175
    %v503 = vunpack.c.l.b16 %v176
    %v504 = vunpack.c.l.b16 %v177
    %v505 = vunpack.c.l.b16 %v178
    %v506 = vunpack.c.l.b16 %v179
    %v507 = vunpack.c.l.b16 %v180
    %v508 = vunpack.c.l.b16 %v181
    %v509 = vunpack.c.l.b16 %v182
    %v510 = vunpack.c.l.b16 %v183
    %v511 = vunpack.c.l.b16 %v184
    %v512 = vunpack.c.l.b16 %v185
    %v513 = vunpack.c.l.b16 %v186
    %v514 = vunpack.c.l.b16 %v187
    %v515 = vunpack.c.l.b16 %v188
    %v516 = vunpack.c.l.b16 %v189
    %v517 = vunpack.c.l.b16 %v190
    %v518 = vunpack.c.l.b16 %v191
    %v519 = vunpack.c.l.b16 %v192
    %v520 = vunpack.c.l.b16 %v193
    %v521 = vunpack.c.l.b16 %v194
    %v522 = vunpack.c.l.b16 %v195
    %v523 = vunpack.c.l.b16 %v196
    %v524 = vunpack.c.l.b16 %v197
    %v525 = vunpack.c.l.b16 %v198
    %v526 = vunpack.c.l.b16 %v199
    %v527 = vunpack.c.l.b16 %v200
    %v528 = vunpack.c.l.b16 %v201
    %v529 = vunpack.c.l.b16 %v202
    %v530 = vunpack.c.l.b16 %v203
    %v531 = vunpack.c.l.b16 %v204
    %v532 = vunpack.c.l.b16 %v205
    %v533 = vpack.c.b16 %v502, %v501
    %v534 = vpack.c.b16 %v504, %v503
    %v535 = vpack.c.b16 %v506, %v505
    %v536 = vpack.c.b16 %v508, %v507
    %v537 = vpack.c.b16 %v510, %v509
    %v538 = vpack.c.b16 %v512, %v511
    %v539 = vpack.c.b16 %v514, %v513
    %v540 = vpack.c.b16 %v516, %v515
    %v541 = vpack.c.b16 %v518, %v517
    %v542 = vpack.c.b16 %v520, %v519
    %v543 = vpack.c.b16 %v522, %v521
    %v544 = vpack.c.b16 %v524, %v523
    %v545 = vpack.c.b16 %v526, %v525
    %v546 = vpack.c.b16 %v528, %v527
    %v547 = vpack.c.b16 %v530, %v529
    %v548 = vpack.c.b16 %v532, %v531
    %565 = vmatprep.subr.bf16.mxu0 0
    %566 = vmatpush1.bf16.msra.mxu0 %v540
    %567 = vmatprep.subr.bf16.mxu0 0
    %568 = vmatpush1.bf16.msra.mxu0 %v539
    %569 = vmatprep.subr.bf16.mxu0 0
    %570 = vmatpush1.bf16.msra.mxu0 %v538
    %571 = vmatprep.subr.bf16.mxu0 0
    %572 = vmatpush1.bf16.msra.mxu0 %v537
    %573 = vmatprep.subr.bf16.mxu0 0
    %574 = vmatpush1.bf16.msra.mxu0 %v536
    %575 = vmatprep.subr.bf16.mxu0 0
    %576 = vmatpush1.bf16.msra.mxu0 %v535
    %577 = vmatprep.subr.bf16.mxu0 0
    %578 = vmatpush1.bf16.msra.mxu0 %v534
    %579 = vmatprep.subr.bf16.mxu0 0
    %580 = vmatpush1.bf16.msra.mxu0 %v533
    %581 = vmatprep.subr.bf16.mxu0 0
    %582 = vmatpush2.bf16.msra.mxu0 %v548
    %583 = vmatprep.subr.bf16.mxu0 0
    %584 = vmatpush2.bf16.msra.mxu0 %v547
    %585 = vmatprep.subr.bf16.mxu0 0
    %586 = vmatpush2.bf16.msra.mxu0 %v546
    %587 = vmatprep.subr.bf16.mxu0 0
    %588 = vmatpush2.bf16.msra.mxu0 %v545
    %589 = vmatprep.subr.bf16.mxu0 0
    %590 = vmatpush2.bf16.msra.mxu0 %v544
    %591 = vmatprep.subr.bf16.mxu0 0
    %592 = vmatpush2.bf16.msra.mxu0 %v543
    %593 = vmatprep.subr.bf16.mxu0 0
    %594 = vmatpush2.bf16.msra.mxu0 %v542
    %595 = vmatprep.subr.bf16.mxu0 0
    %596 = vmatpush2.bf16.msra.mxu0 %v541
    %597 = vmatprep.mubr.bf16.mxu0 %v173
    %598 = vmatmul.mubr.bf16.gmra.mxu0 %v172
    %v599 = vpop.f32.mrf.mxu0
    %v600 = vadd.f32 %v464, %v599
    %v601 = vpop.f32.mrf.mxu0
    %v602 = vpop.f32.mrf.mxu0
    %v603 = vpop.f32.mrf.mxu0
    %604 = vdwg.mxu0
    %v605 = vld [vmem:[#allocation5 + $0x10] sm:$0xff]
    %v606 = vld [vmem:[#allocation5 + $0x30] sm:$0xff]
    %v607 = vld [vmem:[#allocation5 + $0x50] sm:$0xff]
    %v608 = vld [vmem:[#allocation5 + $0x70] sm:$0xff]
    %v609 = vld [vmem:[#allocation5 + $0x90] sm:$0xff]
    %v610 = vld [vmem:[#allocation5 + $0xb0] sm:$0xff]
    %v611 = vld [vmem:[#allocation7 + $0x4] sm:$0x3]
    %v613 = vlaneseq
    %v614 = vshrl.u32 %v613, 7
    %v615 = vsub.s32 0, %v614
    %v616 = vrot.slane %v611, %v615
    %v617 = vlaneseq
    %v618 = vshrl.u32 %v617, 7
    %v619 = vsub.s32 1, %v618
    %v620 = vrot.slane %v611, %v619
    %v629 = vunpack.c.l.b16 %v605
    %v630 = vunpack.c.h.b16 %v605
    %v631 = vunpack.c.l.b16 %v606
    %v632 = vunpack.c.h.b16 %v606
    %v633 = vunpack.c.l.b16 %v607
    %v634 = vunpack.c.h.b16 %v607
    %v635 = vunpack.c.l.b16 %v608
    %v636 = vunpack.c.h.b16 %v608
    %v637 = vunpack.c.l.b16 %v609
    %v638 = vunpack.c.h.b16 %v609
    %v639 = vunpack.c.l.b16 %v610
    %v640 = vunpack.c.h.b16 %v610
    %v641 = vpack.c.b16 %v631, %v629
    %v642 = vpack.c.b16 %v632, %v630
    %v643 = vpack.c.b16 %v635, %v633
    %v644 = vpack.c.b16 %v636, %v634
    %v645 = vpack.c.b16 %v639, %v637
    %v646 = vpack.c.b16 %v640, %v638
    %653 = vmatprep.subr.bf16.mxu0 0
    %654 = vmatpush1.bf16.msra.mxu0 0
    %655 = vmatprep.subr.bf16.mxu0 0
    %656 = vmatpush1.bf16.msra.mxu0 0
    %657 = vmatprep.subr.bf16.mxu0 0
    %658 = vmatpush1.bf16.msra.mxu0 0
    %659 = vmatprep.subr.bf16.mxu0 0
    %660 = vmatpush1.bf16.msra.mxu0 0
    %661 = vmatprep.subr.bf16.mxu0 0
    %662 = vmatpush1.bf16.msra.mxu0 0
    %663 = vmatprep.subr.bf16.mxu0 %v646
    %664 = vmatpush1.bf16.msra.mxu0 %v645
    %665 = vmatprep.subr.bf16.mxu0 %v644
    %666 = vmatpush1.bf16.msra.mxu0 %v643
    %667 = vmatprep.subr.bf16.mxu0 %v642
    %668 = vmatpush1.bf16.msra.mxu0 %v641
    %669 = vmatprep.subr.bf16.mxu0 0
    %670 = vmatpush2.bf16.msra.mxu0 0
    %671 = vmatprep.subr.bf16.mxu0 0
    %672 = vmatpush2.bf16.msra.mxu0 0
    %673 = vmatprep.subr.bf16.mxu0 0
    %674 = vmatpush2.bf16.msra.mxu0 0
    %675 = vmatprep.subr.bf16.mxu0 0
    %676 = vmatpush2.bf16.msra.mxu0 0
    %677 = vmatprep.subr.bf16.mxu0 0
    %678 = vmatpush2.bf16.msra.mxu0 0
    %679 = vmatprep.subr.bf16.mxu0 0
    %680 = vmatpush2.bf16.msra.mxu0 0
    %681 = vmatprep.subr.bf16.mxu0 0
    %682 = vmatpush2.bf16.msra.mxu0 0
    %683 = vmatprep.subr.bf16.mxu0 0
    %684 = vmatpush2.bf16.msra.mxu0 0
    %685 = vmatprep.mubr.bf16.mxu0 0
    %686 = vmatmul.mubr.bf16.gmra.mxu0 %v125
    %v687 = vpop.f32.mrf.mxu0
    %v688 = vadd.f32 %v616, %v687
    %v689 = vpop.f32.mrf.mxu0
    %v690 = vadd.f32 %v620, %v689
    %v691 = vpop.f32.mrf.mxu0
    %v692 = vpop.f32.mrf.mxu0
    %693 = vdwg.mxu0
    %v694 = vmul.f32 %v688, 0.01
    %v695 = vmul.f32 %v690, 0.01
    %v696 = vmax.f32 %v688, %v694
    %v697 = vmax.f32 %v690, %v695
    %v698 = vpack.c.bf16 %v696, %v696
    %v699 = vpack.c.bf16 %v697, %v697
    %v700 = vld [vmem:[#allocation8 + $0x100] sm:$0xf]
    %v701 = vld [vmem:[#allocation8 + $0x104] sm:$0xf]
    %v702 = vld [vmem:[#allocation8 + $0x108] sm:$0xf]
    %v703 = vld [vmem:[#allocation8 + $0x10c] sm:$0xf]
    %v704 = vld [vmem:[#allocation8 + $0x110] sm:$0xf]
    %v705 = vld [vmem:[#allocation8 + $0x114] sm:$0xf]
    %v706 = vld [vmem:[#allocation8 + $0x118] sm:$0xf]
    %v707 = vld [vmem:[#allocation8 + $0x11c] sm:$0xf]
    %v708 = vld [vmem:[#allocation8 + $0x120] sm:$0xf]
    %v709 = vld [vmem:[#allocation8 + $0x124] sm:$0xf]
    %v710 = vld [vmem:[#allocation8 + $0x128] sm:$0xf]
    %v711 = vld [vmem:[#allocation8 + $0x12c] sm:$0xf]
    %v712 = vld [vmem:[#allocation8 + $0x130] sm:$0xf]
    %v713 = vld [vmem:[#allocation8 + $0x134] sm:$0xf]
    %v714 = vld [vmem:[#allocation8 + $0x138] sm:$0xf]
    %v715 = vld [vmem:[#allocation8 + $0x13c] sm:$0xf]
    %v716 = vld [vmem:[#allocation8 + $0x140] sm:$0xf]
    %v717 = vld [vmem:[#allocation8 + $0x144] sm:$0xf]
    %v718 = vld [vmem:[#allocation8 + $0x148] sm:$0xf]
    %v719 = vld [vmem:[#allocation8 + $0x14c] sm:$0xf]
    %v720 = vld [vmem:[#allocation8 + $0x150] sm:$0xf]
    %v721 = vld [vmem:[#allocation8 + $0x154] sm:$0xf]
    %v722 = vld [vmem:[#allocation8 + $0x158] sm:$0xf]
    %v723 = vld [vmem:[#allocation8 + $0x15c] sm:$0xf]
    %v724 = vld [vmem:[#allocation8 + $0x160] sm:$0xf]
    %v725 = vld [vmem:[#allocation8 + $0x164] sm:$0xf]
    %v726 = vld [vmem:[#allocation8 + $0x168] sm:$0xf]
    %v727 = vld [vmem:[#allocation8 + $0x16c] sm:$0xf]
    %v728 = vld [vmem:[#allocation8 + $0x170] sm:$0xf]
    %v729 = vld [vmem:[#allocation8 + $0x174] sm:$0xf]
    %v730 = vld [vmem:[#allocation8 + $0x178] sm:$0xf]
    %v731 = vld [vmem:[#allocation8 + $0x17c] sm:$0xf]
    %v764 = vunpack.c.l.b16 %v700
    %v765 = vunpack.c.l.b16 %v701
    %v766 = vunpack.c.l.b16 %v702
    %v767 = vunpack.c.l.b16 %v703
    %v768 = vunpack.c.l.b16 %v704
    %v769 = vunpack.c.l.b16 %v705
    %v770 = vunpack.c.l.b16 %v706
    %v771 = vunpack.c.l.b16 %v707
    %v772 = vunpack.c.l.b16 %v708
    %v773 = vunpack.c.l.b16 %v709
    %v774 = vunpack.c.l.b16 %v710
    %v775 = vunpack.c.l.b16 %v711
    %v776 = vunpack.c.l.b16 %v712
    %v777 = vunpack.c.l.b16 %v713
    %v778 = vunpack.c.l.b16 %v714
    %v779 = vunpack.c.l.b16 %v715
    %v780 = vunpack.c.l.b16 %v716
    %v781 = vunpack.c.l.b16 %v717
    %v782 = vunpack.c.l.b16 %v718
    %v783 = vunpack.c.l.b16 %v719
    %v784 = vunpack.c.l.b16 %v720
    %v785 = vunpack.c.l.b16 %v721
    %v786 = vunpack.c.l.b16 %v722
    %v787 = vunpack.c.l.b16 %v723
    %v788 = vunpack.c.l.b16 %v724
    %v789 = vunpack.c.l.b16 %v725
    %v790 = vunpack.c.l.b16 %v726
    %v791 = vunpack.c.l.b16 %v727
    %v792 = vunpack.c.l.b16 %v728
    %v793 = vunpack.c.l.b16 %v729
    %v794 = vunpack.c.l.b16 %v730
    %v795 = vunpack.c.l.b16 %v731
    %v796 = vpack.c.b16 %v765, %v764
    %v797 = vpack.c.b16 %v767, %v766
    %v798 = vpack.c.b16 %v769, %v768
    %v799 = vpack.c.b16 %v771, %v770
    %v800 = vpack.c.b16 %v773, %v772
    %v801 = vpack.c.b16 %v775, %v774
    %v802 = vpack.c.b16 %v777, %v776
    %v803 = vpack.c.b16 %v779, %v778
    %v804 = vpack.c.b16 %v781, %v780
    %v805 = vpack.c.b16 %v783, %v782
    %v806 = vpack.c.b16 %v785, %v784
    %v807 = vpack.c.b16 %v787, %v786
    %v808 = vpack.c.b16 %v789, %v788
    %v809 = vpack.c.b16 %v791, %v790
    %v810 = vpack.c.b16 %v793, %v792
    %v811 = vpack.c.b16 %v795, %v794
    %828 = vmatprep.subr.bf16.mxu0 0
    %829 = vmatpush1.bf16.msra.mxu0 %v803
    %830 = vmatprep.subr.bf16.mxu0 0
    %831 = vmatpush1.bf16.msra.mxu0 %v802
    %832 = vmatprep.subr.bf16.mxu0 0
    %833 = vmatpush1.bf16.msra.mxu0 %v801
    %834 = vmatprep.subr.bf16.mxu0 0
    %835 = vmatpush1.bf16.msra.mxu0 %v800
    %836 = vmatprep.subr.bf16.mxu0 0
    %837 = vmatpush1.bf16.msra.mxu0 %v799
    %838 = vmatprep.subr.bf16.mxu0 0
    %839 = vmatpush1.bf16.msra.mxu0 %v798
    %840 = vmatprep.subr.bf16.mxu0 0
    %841 = vmatpush1.bf16.msra.mxu0 %v797
    %842 = vmatprep.subr.bf16.mxu0 0
    %843 = vmatpush1.bf16.msra.mxu0 %v796
    %844 = vmatprep.subr.bf16.mxu0 0
    %845 = vmatpush2.bf16.msra.mxu0 %v811
    %846 = vmatprep.subr.bf16.mxu0 0
    %847 = vmatpush2.bf16.msra.mxu0 %v810
    %848 = vmatprep.subr.bf16.mxu0 0
    %849 = vmatpush2.bf16.msra.mxu0 %v809
    %850 = vmatprep.subr.bf16.mxu0 0
    %851 = vmatpush2.bf16.msra.mxu0 %v808
    %852 = vmatprep.subr.bf16.mxu0 0
    %853 = vmatpush2.bf16.msra.mxu0 %v807
    %854 = vmatprep.subr.bf16.mxu0 0
    %855 = vmatpush2.bf16.msra.mxu0 %v806
    %856 = vmatprep.subr.bf16.mxu0 0
    %857 = vmatpush2.bf16.msra.mxu0 %v805
    %858 = vmatprep.subr.bf16.mxu0 0
    %859 = vmatpush2.bf16.msra.mxu0 %v804
    %860 = vmatprep.mubr.bf16.mxu0 %v699
    %861 = vmatmul.mubr.bf16.gmra.mxu0 %v698
    %v862 = vpop.f32.mrf.mxu0
    %v863 = vadd.f32 0.0, %v862
    %v864 = vpop.f32.mrf.mxu0
    %v865 = vpop.f32.mrf.mxu0
    %v866 = vpop.f32.mrf.mxu0
    %867 = vdwg.mxu0
    %v868 = vadd.f32 %v600, %v863
    %v869 = vld [vmem:[#allocation5 + $0x18] sm:$0xff]
    %v870 = vld [vmem:[#allocation5 + $0x38] sm:$0xff]
    %v871 = vld [vmem:[#allocation5 + $0x58] sm:$0xff]
    %v872 = vld [vmem:[#allocation5 + $0x78] sm:$0xff]
    %v873 = vld [vmem:[#allocation5 + $0x98] sm:$0xff]
    %v874 = vld [vmem:[#allocation5 + $0xb8] sm:$0xff]
    %v875 = vld [vmem:[#allocation7 + $0x6] sm:$0x3]
    %v877 = vlaneseq
    %v878 = vshrl.u32 %v877, 7
    %v879 = vsub.s32 0, %v878
    %v880 = vrot.slane %v875, %v879
    %v881 = vlaneseq
    %v882 = vshrl.u32 %v881, 7
    %v883 = vsub.s32 1, %v882
    %v884 = vrot.slane %v875, %v883
    %v893 = vunpack.c.l.b16 %v869
    %v894 = vunpack.c.h.b16 %v869
    %v895 = vunpack.c.l.b16 %v870
    %v896 = vunpack.c.h.b16 %v870
    %v897 = vunpack.c.l.b16 %v871
    %v898 = vunpack.c.h.b16 %v871
    %v899 = vunpack.c.l.b16 %v872
    %v900 = vunpack.c.h.b16 %v872
    %v901 = vunpack.c.l.b16 %v873
    %v902 = vunpack.c.h.b16 %v873
    %v903 = vunpack.c.l.b16 %v874
    %v904 = vunpack.c.h.b16 %v874
    %v905 = vpack.c.b16 %v895, %v893
    %v906 = vpack.c.b16 %v896, %v894
    %v907 = vpack.c.b16 %v899, %v897
    %v908 = vpack.c.b16 %v900, %v898
    %v909 = vpack.c.b16 %v903, %v901
    %v910 = vpack.c.b16 %v904, %v902
    %917 = vmatprep.subr.bf16.mxu0 0
    %918 = vmatpush1.bf16.msra.mxu0 0
    %919 = vmatprep.subr.bf16.mxu0 0
    %920 = vmatpush1.bf16.msra.mxu0 0
    %921 = vmatprep.subr.bf16.mxu0 0
    %922 = vmatpush1.bf16.msra.mxu0 0
    %923 = vmatprep.subr.bf16.mxu0 0
    %924 = vmatpush1.bf16.msra.mxu0 0
    %925 = vmatprep.subr.bf16.mxu0 0
    %926 = vmatpush1.bf16.msra.mxu0 0
    %927 = vmatprep.subr.bf16.mxu0 %v910
    %928 = vmatpush1.bf16.msra.mxu0 %v909
    %929 = vmatprep.subr.bf16.mxu0 %v908
    %930 = vmatpush1.bf16.msra.mxu0 %v907
    %931 = vmatprep.subr.bf16.mxu0 %v906
    %932 = vmatpush1.bf16.msra.mxu0 %v905
    %933 = vmatprep.subr.bf16.mxu0 0
    %934 = vmatpush2.bf16.msra.mxu0 0
    %935 = vmatprep.subr.bf16.mxu0 0
    %936 = vmatpush2.bf16.msra.mxu0 0
    %937 = vmatprep.subr.bf16.mxu0 0
    %938 = vmatpush2.bf16.msra.mxu0 0
    %939 = vmatprep.subr.bf16.mxu0 0
    %940 = vmatpush2.bf16.msra.mxu0 0
    %941 = vmatprep.subr.bf16.mxu0 0
    %942 = vmatpush2.bf16.msra.mxu0 0
    %943 = vmatprep.subr.bf16.mxu0 0
    %944 = vmatpush2.bf16.msra.mxu0 0
    %945 = vmatprep.subr.bf16.mxu0 0
    %946 = vmatpush2.bf16.msra.mxu0 0
    %947 = vmatprep.subr.bf16.mxu0 0
    %948 = vmatpush2.bf16.msra.mxu0 0
    %949 = vmatprep.mubr.bf16.mxu0 0
    %950 = vmatmul.mubr.bf16.gmra.mxu0 %v125
    %v951 = vpop.f32.mrf.mxu0
    %v952 = vadd.f32 %v880, %v951
    %v953 = vpop.f32.mrf.mxu0
    %v954 = vadd.f32 %v884, %v953
    %v955 = vpop.f32.mrf.mxu0
    %v956 = vpop.f32.mrf.mxu0
    %957 = vdwg.mxu0
    %v958 = vmul.f32 %v952, 0.01
    %v959 = vmul.f32 %v954, 0.01
    %v960 = vmax.f32 %v952, %v958
    %v961 = vmax.f32 %v954, %v959
    %v962 = vpack.c.bf16 %v960, %v960
    %v963 = vpack.c.bf16 %v961, %v961
    %v964 = vld [vmem:[#allocation8 + $0x180] sm:$0xf]
    %v965 = vld [vmem:[#allocation8 + $0x184] sm:$0xf]
    %v966 = vld [vmem:[#allocation8 + $0x188] sm:$0xf]
    %v967 = vld [vmem:[#allocation8 + $0x18c] sm:$0xf]
    %v968 = vld [vmem:[#allocation8 + $0x190] sm:$0xf]
    %v969 = vld [vmem:[#allocation8 + $0x194] sm:$0xf]
    %v970 = vld [vmem:[#allocation8 + $0x198] sm:$0xf]
    %v971 = vld [vmem:[#allocation8 + $0x19c] sm:$0xf]
    %v972 = vld [vmem:[#allocation8 + $0x1a0] sm:$0xf]
    %v973 = vld [vmem:[#allocation8 + $0x1a4] sm:$0xf]
    %v974 = vld [vmem:[#allocation8 + $0x1a8] sm:$0xf]
    %v975 = vld [vmem:[#allocation8 + $0x1ac] sm:$0xf]
    %v976 = vld [vmem:[#allocation8 + $0x1b0] sm:$0xf]
    %v977 = vld [vmem:[#allocation8 + $0x1b4] sm:$0xf]
    %v978 = vld [vmem:[#allocation8 + $0x1b8] sm:$0xf]
    %v979 = vld [vmem:[#allocation8 + $0x1bc] sm:$0xf]
    %v980 = vld [vmem:[#allocation8 + $0x1c0] sm:$0xf]
    %v981 = vld [vmem:[#allocation8 + $0x1c4] sm:$0xf]
    %v982 = vld [vmem:[#allocation8 + $0x1c8] sm:$0xf]
    %v983 = vld [vmem:[#allocation8 + $0x1cc] sm:$0xf]
    %v984 = vld [vmem:[#allocation8 + $0x1d0] sm:$0xf]
    %v985 = vld [vmem:[#allocation8 + $0x1d4] sm:$0xf]
    %v986 = vld [vmem:[#allocation8 + $0x1d8] sm:$0xf]
    %v987 = vld [vmem:[#allocation8 + $0x1dc] sm:$0xf]
    %v988 = vld [vmem:[#allocation8 + $0x1e0] sm:$0xf]
    %v989 = vld [vmem:[#allocation8 + $0x1e4] sm:$0xf]
    %v990 = vld [vmem:[#allocation8 + $0x1e8] sm:$0xf]
    %v991 = vld [vmem:[#allocation8 + $0x1ec] sm:$0xf]
    %v992 = vld [vmem:[#allocation8 + $0x1f0] sm:$0xf]
    %v993 = vld [vmem:[#allocation8 + $0x1f4] sm:$0xf]
    %v994 = vld [vmem:[#allocation8 + $0x1f8] sm:$0xf]
    %v995 = vld [vmem:[#allocation8 + $0x1fc] sm:$0xf]
    %v1028 = vunpack.c.l.b16 %v964
    %v1029 = vunpack.c.l.b16 %v965
    %v1030 = vunpack.c.l.b16 %v966
    %v1031 = vunpack.c.l.b16 %v967
    %v1032 = vunpack.c.l.b16 %v968
    %v1033 = vunpack.c.l.b16 %v969
    %v1034 = vunpack.c.l.b16 %v970
    %v1035 = vunpack.c.l.b16 %v971
    %v1036 = vunpack.c.l.b16 %v972
    %v1037 = vunpack.c.l.b16 %v973
    %v1038 = vunpack.c.l.b16 %v974
    %v1039 = vunpack.c.l.b16 %v975
    %v1040 = vunpack.c.l.b16 %v976
    %v1041 = vunpack.c.l.b16 %v977
    %v1042 = vunpack.c.l.b16 %v978
    %v1043 = vunpack.c.l.b16 %v979
    %v1044 = vunpack.c.l.b16 %v980
    %v1045 = vunpack.c.l.b16 %v981
    %v1046 = vunpack.c.l.b16 %v982
    %v1047 = vunpack.c.l.b16 %v983
    %v1048 = vunpack.c.l.b16 %v984
    %v1049 = vunpack.c.l.b16 %v985
    %v1050 = vunpack.c.l.b16 %v986
    %v1051 = vunpack.c.l.b16 %v987
    %v1052 = vunpack.c.l.b16 %v988
    %v1053 = vunpack.c.l.b16 %v989
    %v1054 = vunpack.c.l.b16 %v990
    %v1055 = vunpack.c.l.b16 %v991
    %v1056 = vunpack.c.l.b16 %v992
    %v1057 = vunpack.c.l.b16 %v993
    %v1058 = vunpack.c.l.b16 %v994
    %v1059 = vunpack.c.l.b16 %v995
    %v1060 = vpack.c.b16 %v1029, %v1028
    %v1061 = vpack.c.b16 %v1031, %v1030
    %v1062 = vpack.c.b16 %v1033, %v1032
    %v1063 = vpack.c.b16 %v1035, %v1034
    %v1064 = vpack.c.b16 %v1037, %v1036
    %v1065 = vpack.c.b16 %v1039, %v1038
    %v1066 = vpack.c.b16 %v1041, %v1040
    %v1067 = vpack.c.b16 %v1043, %v1042
    %v1068 = vpack.c.b16 %v1045, %v1044
    %v1069 = vpack.c.b16 %v1047, %v1046
    %v1070 = vpack.c.b16 %v1049, %v1048
    %v1071 = vpack.c.b16 %v1051, %v1050
    %v1072 = vpack.c.b16 %v1053, %v1052
    %v1073 = vpack.c.b16 %v1055, %v1054
    %v1074 = vpack.c.b16 %v1057, %v1056
    %v1075 = vpack.c.b16 %v1059, %v1058
    %1092 = vmatprep.subr.bf16.mxu0 0
    %1093 = vmatpush1.bf16.msra.mxu0 %v1067
    %1094 = vmatprep.subr.bf16.mxu0 0
    %1095 = vmatpush1.bf16.msra.mxu0 %v1066
    %1096 = vmatprep.subr.bf16.mxu0 0
    %1097 = vmatpush1.bf16.msra.mxu0 %v1065
    %1098 = vmatprep.subr.bf16.mxu0 0
    %1099 = vmatpush1.bf16.msra.mxu0 %v1064
    %1100 = vmatprep.subr.bf16.mxu0 0
    %1101 = vmatpush1.bf16.msra.mxu0 %v1063
    %1102 = vmatprep.subr.bf16.mxu0 0
    %1103 = vmatpush1.bf16.msra.mxu0 %v1062
    %1104 = vmatprep.subr.bf16.mxu0 0
    %1105 = vmatpush1.bf16.msra.mxu0 %v1061
    %1106 = vmatprep.subr.bf16.mxu0 0
    %1107 = vmatpush1.bf16.msra.mxu0 %v1060
    %1108 = vmatprep.subr.bf16.mxu0 0
    %1109 = vmatpush2.bf16.msra.mxu0 %v1075
    %1110 = vmatprep.subr.bf16.mxu0 0
    %1111 = vmatpush2.bf16.msra.mxu0 %v1074
    %1112 = vmatprep.subr.bf16.mxu0 0
    %1113 = vmatpush2.bf16.msra.mxu0 %v1073
    %1114 = vmatprep.subr.bf16.mxu0 0
    %1115 = vmatpush2.bf16.msra.mxu0 %v1072
    %1116 = vmatprep.subr.bf16.mxu0 0
    %1117 = vmatpush2.bf16.msra.mxu0 %v1071
    %1118 = vmatprep.subr.bf16.mxu0 0
    %1119 = vmatpush2.bf16.msra.mxu0 %v1070
    %1120 = vmatprep.subr.bf16.mxu0 0
    %1121 = vmatpush2.bf16.msra.mxu0 %v1069
    %1122 = vmatprep.subr.bf16.mxu0 0
    %1123 = vmatpush2.bf16.msra.mxu0 %v1068
    %1124 = vmatprep.mubr.bf16.mxu0 %v963
    %1125 = vmatmul.mubr.bf16.gmra.mxu0 %v962
    %v1126 = vpop.f32.mrf.mxu0
    %v1127 = vadd.f32 0.0, %v1126
    %v1128 = vpop.f32.mrf.mxu0
    %v1129 = vpop.f32.mrf.mxu0
    %v1130 = vpop.f32.mrf.mxu0
    %1131 = vdwg.mxu0
    %v1132 = vadd.f32 %v868, %v1127
    %v1133 = vld [vmem:[%s4] sm:$0x1]
    %v1135 = vlaneseq
    %v1136 = vshrl.u32 %v1135, 7
    %v1137 = vsub.s32 0, %v1136
    %v1138 = vrot.slane %v1133, %v1137
    %v1140 = vadd.f32 %v1132, %v1138
    %1141 = vst [vmem:[#allocation10] sm:$0xff] %v1140
    // Predicated region
    $region38: #{tpu_custom_call.1} parent=1 // pred_check
      _
    $region39: #{tpu_custom_call.1} parent=1 // pred_check_branch
      %1143 = sbr.rel (0) target = $region41
    $region40: #{tpu_custom_call.1} parent=1 // pred_region
      %s1145 = ssub.s32 128, 128
      %1146 = vsyncadd [#allocation4], %s1145
      %s1148 = sshll.u32 [#allocation10], 4
      %s1149 = int_to_ptr.vmem [resolvable:$true] %s1148
      %1151 = dma.vmem_to_hbm [thread:$0]  %s1149, 128, %s5, [#allocation4]
    $region41: #{tpu_custom_call.1} parent=1 // pred_fallthru
      _
    // Predicated region
    $region42: #{tpu_custom_call.1} parent=1 // pred_check
      _
    $region43: #{tpu_custom_call.1} parent=1 // pred_check_branch
      %1153 = sbr.rel (0) target = $region45
    $region44: #{tpu_custom_call.1} parent=1 // pred_region
      %1154 = dma.done [#allocation4], 128
    $region45: #{tpu_custom_call.1} parent=1 // pred_fallthru
      _
    %1155 = vsyncpa [#allocation3], 1
    %1156 = vsyncpa [#allocation6], 1
    %1157 = vsyncpa [#allocation9], 1
    %1158 = vsyncpa [#allocation4], 1

</llo_original>
